<compile_context>
chip_gen: v5e
topology: v5e:2x2
jax: 0.10.0
libtpu: 0.0.40
codegen_flags: <defaults>
</compile_context>

<pallas_src>
import functools
import math

import jax
import jax.numpy as jnp
from jax import lax
from jax.experimental import pallas as pl
from jax.experimental.pallas import tpu as pltpu


def _round_up(x: int, m: int) -> int:
    return (x + m - 1) // m * m


def _single_buffer_supported() -> bool:
    """Probe whether BlockSpec(pipeline_mode=pl.Buffered(1)) is available."""
    if not hasattr(pl, "Buffered"):
        return False
    try:
        pl.BlockSpec((8, 128), lambda i: (0, 0), pipeline_mode=pl.Buffered(1))
        return True
    except Exception:
        return False


_SINGLE_BUF_TABLE = _single_buffer_supported()


def _table_spec(block_shape, index_map):
    """BlockSpec for the grid-invariant embedding table (single-buffered if possible)."""
    if _SINGLE_BUF_TABLE:
        return pl.BlockSpec(block_shape, index_map, pipeline_mode=pl.Buffered(1))
    return pl.BlockSpec(block_shape, index_map)


# --------------------------------------------------------------------------- #
# Path 1: small-vocab one-hot matmul on the MXU.
# --------------------------------------------------------------------------- #
def _embed_onehot_kernel(ids_ref, table_ref, out_ref, *, scale, vocab_size):
    # ids_ref: (T, 1) int32 VMEM block; table_ref: (V, D_pad) VMEM-resident.
    t = out_ref.shape[0]
    iota = lax.broadcasted_iota(jnp.int32, (t, vocab_size), 1)          # (T, V)
    onehot = (ids_ref[...] == iota).astype(table_ref.dtype)             # exact 0/1
    acc = jnp.dot(onehot, table_ref[...], preferred_element_type=jnp.float32)
    out_ref[...] = (acc * scale).astype(out_ref.dtype)


# --------------------------------------------------------------------------- #
# Path 2: VMEM-resident table, per-token dynamic-index gather.
# Works for 2-D (V, D_pad) and tile-dense 3-D (V, D_pad//128, 128) layouts.
# --------------------------------------------------------------------------- #
def _embed_resident_kernel(ids_ref, table_ref, out_ref, *, scale, tile_tokens):
    base = pl.program_id(0) * tile_tokens

    def body(t, carry):
        idx = ids_ref[base + t]                    # scalar read from SMEM
        out_ref[t] = table_ref[idx] * scale        # scale fused with the store
        return carry

    lax.fori_loop(0, tile_tokens, body, 0, unroll=8)


# --------------------------------------------------------------------------- #
# Path 3: table stays in HBM; row DMAs land directly in the output block.
# --------------------------------------------------------------------------- #
def _embed_hbm_gather_kernel(ids_ref, table_hbm_ref, out_ref, sem_ref, *,
                             scale, tile_tokens):
    base = pl.program_id(0) * tile_tokens

    # Issue all T row DMAs for this tile so per-row HBM latency overlaps across
    # the whole tile; destinations are rows of the (pipelined) output block.
    def issue(t, carry):
        idx = ids_ref[base + t]
        pltpu.make_async_copy(table_hbm_ref.at[idx], out_ref.at[t],
                              sem_ref.at[0]).start()
        return carry

    lax.fori_loop(0, tile_tokens, issue, 0, unroll=8)

    # One wait whose descriptor covers the whole tile: the DMA semaphore counts
    # bytes, and the T row copies above total exactly one full output block.
    pltpu.make_async_copy(out_ref, out_ref, sem_ref.at[0]).wait()

    out_ref[...] = out_ref[...] * scale


# --------------------------------------------------------------------------- #
# Wrapper
# --------------------------------------------------------------------------- #
def token_embedding(token_ids: jax.Array, table: jax.Array, *,
                    tile_tokens: int | None = None,
                    force_path: str | None = None,
                    onehot_max_vocab: int = 2048) -> jax.Array:
    """Pallas TPU equivalent of: nn.Embedding(vocab, d_model)(x) * sqrt(d_model)."""
    if force_path is not None and force_path not in ("onehot", "resident", "hbm"):
        raise ValueError(f"unknown force_path: {force_path}")

    B, S = token_ids.shape
    V, D = table.shape
    scale = math.sqrt(float(D))
    dtype = table.dtype
    itemsize = jnp.dtype(dtype).itemsize

    # Lane-dense output: pad d_model to a multiple of 128 only when necessary
    # (D % 128 == 0 is the common case; then the trailing slice is a no-op).
    D_pad = _round_up(D, 128)
    table_p = table if D_pad == D else jnp.pad(table, ((0, 0), (0, D_pad - D)))
    K = D_pad // 128

    n_tok = B * S
    pack = max(8, 32 // max(itemsize, 1))       # sublane pack: f32 8, bf16 16, ...
    row_bytes = D_pad * itemsize

    # ---- VMEM budgeting (per-TensorCore: v7x 64 MiB vs v5e/v6e 128 MiB) ---- #
    try:
        vmem_cap = int(pltpu.get_tpu_info().vmem_capacity_bytes)
    except Exception:
        vmem_cap = 64 * 1024 * 1024             # conservative (v7x per-core)
    budget = (vmem_cap * 3) // 4
    headroom = 4 << 20                          # Mosaic internal scratch etc.
    table_copies = 1 if _SINGLE_BUF_TABLE else 2
    table_bytes = V * D_pad * itemsize

    def _tile(max_tokens: int, target_bytes: int = 2 << 20) -> int:
        # Byte-sized output blocks (~2 MB) instead of a flat token cap.
        t = tile_tokens if tile_tokens is not None else max(target_bytes // row_bytes, 1)
        t = _round_up(int(t), pack)
        t = min(t, _round_up(n_tok, pack), _round_up(max_tokens, pack))
        return max(t, pack)

    t_onehot = _tile(max_tokens=512)
    t_res = _tile(max_tokens=2048)
    t_hbm = _tile(max_tokens=1024)

    onehot_extra = (2 * t_onehot * 128 * 4                     # (T,1) id blocks
                    + t_onehot * _round_up(V, 128) * itemsize)  # one-hot matrix
    onehot_ok = (V <= onehot_max_vocab and
                 table_copies * table_bytes + 2 * t_onehot * row_bytes
                 + onehot_extra + headroom <= budget)
    resident_ok = (table_copies * table_bytes + 2 * t_res * row_bytes
                   + headroom <= budget)

    if force_path is not None:
        path = force_path
    else:
        path = "onehot" if onehot_ok else ("resident" if resident_ok else "hbm")

    T = {"onehot": t_onehot, "resident": t_res, "hbm": t_hbm}[path]
    n_pad = _round_up(n_tok, T)
    grid = (n_pad // T,)

    flat_ids = jnp.clip(token_ids.reshape(n_tok).astype(jnp.int32), 0, V - 1)
    if n_pad != n_tok:
        flat_ids = jnp.pad(flat_ids, (0, n_pad - n_tok))   # padded ids -> row 0

    # Tile-dense row layout for the gather paths when each row is whole vregs.
    use_3d = (path != "onehot") and (K % 8 == 0)

    if path == "onehot":
        kernel = functools.partial(_embed_onehot_kernel, scale=scale, vocab_size=V)
        grid_spec = pltpu.PrefetchScalarGridSpec(
            num_scalar_prefetch=0,
            grid=grid,
            in_specs=[pl.BlockSpec((T, 1), lambda i: (i, 0)),
                      _table_spec((V, D_pad), lambda i: (0, 0))],
            out_specs=pl.BlockSpec((T, D_pad), lambda i: (i, 0)),
        )
        operands = (flat_ids.reshape(n_pad, 1), table_p)
        out_sds = jax.ShapeDtypeStruct((n_pad, D_pad), dtype)
        semantics = ("parallel",)
        vmem_need = table_copies * table_bytes + 2 * T * row_bytes + onehot_extra

    elif path == "resident":
        kernel = functools.partial(_embed_resident_kernel, scale=scale, tile_tokens=T)
        if use_3d:
            tab = table_p.reshape(V, K, 128)
            tab_spec = _table_spec((V, K, 128), lambda i, ids: (0, 0, 0))
            out_spec = pl.BlockSpec((T, K, 128), lambda i, ids: (i, 0, 0))
            out_sds = jax.ShapeDtypeStruct((n_pad, K, 128), dtype)
        else:
            tab = table_p
            tab_spec = _table_spec((V, D_pad), lambda i, ids: (0, 0))
            out_spec = pl.BlockSpec((T, D_pad), lambda i, ids: (i, 0))
            out_sds = jax.ShapeDtypeStruct((n_pad, D_pad), dtype)
        grid_spec = pltpu.PrefetchScalarGridSpec(
            num_scalar_prefetch=1,           # flat ids -> SMEM
            grid=grid,
            in_specs=[tab_spec],
            out_specs=out_spec,
        )
        operands = (flat_ids, tab)
        semantics = ("parallel",)
        vmem_need = table_copies * table_bytes + 2 * T * row_bytes

    else:  # "hbm"
        kernel = functools.partial(_embed_hbm_gather_kernel, scale=scale, tile_tokens=T)
        tab = table_p.reshape(V, K, 128) if use_3d else table_p
        if use_3d:
            out_spec = pl.BlockSpec((T, K, 128), lambda i, ids: (i, 0, 0))
            out_sds = jax.ShapeDtypeStruct((n_pad, K, 128), dtype)
        else:
            out_spec = pl.BlockSpec((T, D_pad), lambda i, ids: (i, 0))
            out_sds = jax.ShapeDtypeStruct((n_pad, D_pad), dtype)
        grid_spec = pltpu.PrefetchScalarGridSpec(
            num_scalar_prefetch=1,           # flat ids -> SMEM
            grid=grid,
            in_specs=[pl.BlockSpec(memory_space=pl.ANY)],   # raw HBM table
            out_specs=out_spec,
            scratch_shapes=[pltpu.SemaphoreType.DMA((1,))],
        )
        operands = (flat_ids, tab)
        semantics = ("arbitrary",)
        vmem_need = 2 * T * row_bytes

    vmem_limit = int(min(vmem_cap, max(vmem_need + headroom, 32 << 20)))

    out_flat = pl.pallas_call(
        kernel,
        out_shape=out_sds,
        grid_spec=grid_spec,
        compiler_params=pltpu.CompilerParams(
            dimension_semantics=semantics,
            vmem_limit_bytes=vmem_limit),
    )(*operands)

    if out_flat.ndim == 3:
        out_flat = out_flat.reshape(n_pad, D_pad)   # free contiguous reshape
    if n_pad != n_tok or D_pad != D:
        out_flat = out_flat[:n_tok, :D]             # only when padding was needed
    return out_flat.reshape(B, S, D)


if __name__ == "__main__":
    # Small, deterministic setup consistent with TokenEmbedding(vocab_size, d_model).
    vocab_size, d_model = 32, 128
    batch, seq = 2, 8

    key = jax.random.PRNGKey(0)
    k_tab, k_ids = jax.random.split(key)

    table = jax.random.normal(k_tab, (vocab_size, d_model), dtype=jnp.float32)
    token_ids = jax.random.randint(k_ids, (batch, seq), 0, vocab_size, dtype=jnp.int32)

    # Reference (plain JAX) of the exact PyTorch semantics.
    ref = jnp.take(table, token_ids, axis=0) * math.sqrt(float(d_model))

    # Default path for a small vocab: one-hot MXU matmul.
    out = jax.block_until_ready(token_embedding(token_ids, table))
    assert out.shape == (batch, seq, d_model)
    assert jnp.allclose(out, ref, atol=1e-4, rtol=1e-4)

    # VMEM-resident gather path and HBM manual-DMA gather path (forced so every
    # code path is exercised and verified).
    for p in ("resident", "hbm"):
        out_p = jax.block_until_ready(token_embedding(token_ids, table, force_path=p))
        assert jnp.allclose(out_p, ref, atol=1e-4, rtol=1e-4)

    # Exercise the tile-dense (V, D/128, 128) row layout (d_model % 1024 == 0).
    d_big, v_big = 1024, 64
    table_b = jax.random.normal(k_tab, (v_big, d_big), dtype=jnp.float32)
    ids_b = jax.random.randint(k_ids, (batch, seq), 0, v_big, dtype=jnp.int32)
    ref_b = jnp.take(table_b, ids_b, axis=0) * math.sqrt(float(d_big))
    for p in ("resident", "hbm"):
        out_b = jax.block_until_ready(token_embedding(ids_b, table_b, force_path=p))
        assert jnp.allclose(out_b, ref_b, atol=1e-4, rtol=1e-4)

    print("KERNEL_OK")
</pallas_src>

<mosaic_0001>
module attributes {stable_mosaic.version = 11 : i64} {
  func.func @_embed_onehot_kernel(%arg0: i32, %arg1: memref<16x1xi32, #tpu.memory_space<vmem>>, %arg2: memref<32x128xf32, #tpu.memory_space<vmem>>, %arg3: memref<16x128xf32, #tpu.memory_space<vmem>>) attributes {dimension_semantics = [#tpu.dimension_semantics<parallel>], iteration_bounds = array<i64: 1>, scalar_prefetch = 0 : i64, scratch_operands = 0 : i64, tpu.core_type = #tpu.core_type<tc>, window_params = [{transform_indices = @transform_0, window_bounds = array<i64: 16, 1>}, {pipeline_mode = #tpu.pipeline_mode<synchronous>, transform_indices = @transform_1, window_bounds = array<i64: 32, 128>}, {transform_indices = @transform_2, window_bounds = array<i64: 16, 128>}]} {
    %0 = tpu.iota {dimensions = array<i32: 1>} : vector<16x32xi32>
    %c0 = arith.constant 0 : index
    %c0_0 = arith.constant 0 : index
    %1 = vector.load %arg1[%c0, %c0_0] : memref<16x1xi32, #tpu.memory_space<vmem>>, vector<16x1xi32>
    %2 = vector.broadcast %1 : vector<16x1xi32> to vector<16x32xi32>
    %3 = arith.cmpi eq, %2, %0 : vector<16x32xi32>
    %4 = arith.extui %3 : vector<16x32xi1> to vector<16x32xi32>
    %5 = arith.sitofp %4 : vector<16x32xi32> to vector<16x32xf32>
    %c0_1 = arith.constant 0 : index
    %c0_2 = arith.constant 0 : index
    %6 = vector.load %arg2[%c0_1, %c0_2] : memref<32x128xf32, #tpu.memory_space<vmem>>, vector<32x128xf32>
    %cst = arith.constant dense<0.000000e+00> : vector<16x128xf32>
    %7 = tpu.matmul %5, %6, %cst {dimension_numbers = #tpu.dot_dimension_numbers<[1], [0], [0], [1], [0, 0, 1, 1], [], []>} : vector<16x32xf32>, vector<32x128xf32>, vector<16x128xf32> -> vector<16x128xf32>
    %cst_3 = arith.constant 11.3137083 : f32
    %8 = vector.broadcast %cst_3 : f32 to vector<16x128xf32>
    %9 = arith.mulf %7, %8 : vector<16x128xf32>
    %c0_4 = arith.constant 0 : index
    %c0_5 = arith.constant 0 : index
    %10 = vector.load %arg3[%c0_4, %c0_5] : memref<16x128xf32, #tpu.memory_space<vmem>>, vector<16x128xf32>
    tpu.vector_store %arg3[%c0_4, %c0_5], %9 {strides = array<i32>} : memref<16x128xf32, #tpu.memory_space<vmem>>, vector<16x128xf32>,
    return
  }
  func.func @transform_0(%arg0: i32) -> (i32, i32) {
    %c0_i32 = arith.constant 0 : i32
    %c0_i32_0 = arith.constant 0 : i32
    return %arg0, %c0_i32 : i32, i32
  }
  func.func @transform_1(%arg0: i32) -> (i32, i32) {
    %c0_i32 = arith.constant 0 : i32
    %c0_i32_0 = arith.constant 0 : i32
    %c0_i32_1 = arith.constant 0 : i32
    return %c0_i32, %c0_i32_0 : i32, i32
  }
  func.func @transform_2(%arg0: i32) -> (i32, i32) {
    %c0_i32 = arith.constant 0 : i32
    %c0_i32_0 = arith.constant 0 : i32
    return %arg0, %c0_i32 : i32, i32
  }
}

</mosaic_0001>

<llo_original>
// kernel: tpu_custom_call.1
$region0: #{tpu_custom_call.1}
  #allocation0 [shape = 'u32[]', space=smem, size = 0x4, offset = 0x4, fixed_abs, tag = 'smem constant byte address 0x4 - core index']
  #allocation1 [shape = 'u32[72,128]{1,0:T(1,128)}', space=vmem, size = 0x9000, scoped, tag = 'internal scratch']
  %s0 = inlined_call_operand.vmem [shape: s32[16,1], index: 0, kind: input, shape index: {}]
  %s1 = inlined_call_operand.hbm [shape: f32[32,128], index: 1, kind: input, shape index: {}]
  %s2 = inlined_call_operand.hbm [shape: f32[16,128], index: 2, kind: output, shape index: {}]
  %s3 = sld [smem:[#allocation0]]
  $region22: #{tpu_custom_call.1} parent=0
    _
  %s5 = ssub.s32 1, %s3
  %s6 = scalar_select 0, %s5, %s3
  $region1: #{tpu_custom_call.1} parent=0
    #allocation2 [shape = 'u8[16384]{0}', space=vmem, size = 0x4000, scoped, tag = 'input window, operand 1, single buffered']
    #allocation3 [shape = 's32[1]{0}', space=sflag, size = 0x4, scoped, tag = 'scoped memory for tpu_custom_call.1']
    #allocation4 [shape = 's32[1]{0}', space=sflag, size = 0x4, scoped, tag = 'scoped memory for tpu_custom_call.1']
    #allocation5 [shape = 'u8[8192]{0}', space=vmem, size = 0x2000, scoped, tag = 'output window, operand 0, single buffered']
    %7 = vsyncpa [#allocation3], 0
    %8 = vsyncpa [#allocation4], 0
    // Predicated region
    $region2: #{tpu_custom_call.1} parent=1 // pred_check
      _
    $region3: #{tpu_custom_call.1} parent=1 // pred_check_branch
      %10 = sbr.rel (0) target = $region5
    $region4: #{tpu_custom_call.1} parent=1 // pred_region
      _
    $region5: #{tpu_custom_call.1} parent=1 // pred_fallthru
      _
    // Predicated region
    $region6: #{tpu_custom_call.1} parent=1 // pred_check
      _
    $region7: #{tpu_custom_call.1} parent=1 // pred_check_branch
      %12 = sbr.rel (0) target = $region9
    $region8: #{tpu_custom_call.1} parent=1 // pred_region
      %14 = vsyncadd [#allocation3], 0
      %s15 = sshll.u32 %s1, 4
      %s16 = int_to_ptr.hbm [resolvable:$true] %s15
      %s17 = sshll.u32 [#allocation2], 4
      %s18 = int_to_ptr.vmem [resolvable:$true] %s17
      %23 = dma.hbm_to_vmem [thread:$0]  %s16, 512, %s18, [#allocation3], 128, 128, 8
    $region9: #{tpu_custom_call.1} parent=1 // pred_fallthru
      _
    // Predicated region
    $region10: #{tpu_custom_call.1} parent=1 // pred_check
      _
    $region11: #{tpu_custom_call.1} parent=1 // pred_check_branch
      %25 = sbr.rel (0) target = $region13
    $region12: #{tpu_custom_call.1} parent=1 // pred_region
      %27 = dma.done [#allocation3], 512
    $region13: #{tpu_custom_call.1} parent=1 // pred_fallthru
      _
    %v28 = vlaneseq
    %v29 = vand.u32 %v28, 127
    %v30 = vld [vmem:[%s0] sm:$0xff]
    %v31 = vld [vmem:[%s0 + $0x8] sm:$0xff]
    %32 = vset.pattern.permute.xlu0 0
    %33 = vperm.xlu0 %32, %v30
    %v34 = vpop.permute.xlu0 %33
    %35 = vset.pattern.permute.xlu0 0
    %36 = vperm.xlu0 %35, %v31
    %v37 = vpop.permute.xlu0 %36
    %vm38 = vcmp.eq.s32.totalorder %v34, %v29
    %vm39 = vcmp.eq.s32.totalorder %v37, %v29
    %v40 = vsel %vm38, 1, 0
    %v41 = vsel %vm39, 1, 0
    %v42 = vcvt.s32.f32 %v40
    %v43 = vcvt.s32.f32 %v41
    %v44 = vld [vmem:[#allocation2] sm:$0xff]
    %v45 = vld [vmem:[#allocation2 + $0x8] sm:$0xff]
    %v46 = vld [vmem:[#allocation2 + $0x10] sm:$0xff]
    %v47 = vld [vmem:[#allocation2 + $0x18] sm:$0xff]
    %vm48 = vcmask 261120
    %v50 = vsel %vm48, %v42, 0
    %v53 = vsel %vm48, %v43, 0
    %55 = vmatpush.msra.mxu0 0.0
    %56 = vmatpush.msra.mxu0 0.0
    %57 = vmatpush.msra.mxu0 0.0
    %58 = vmatpush.msra.mxu0 0.0
    %59 = vmatpush.msra.mxu0 0.0
    %60 = vmatpush.msra.mxu0 0.0
    %61 = vmatpush.msra.mxu0 0.0
    %62 = vmatpush.msra.mxu0 0.0
    %63 = vmatpush.msra.mxu0 0.0
    %64 = vmatpush.msra.mxu0 0.0
    %65 = vmatpush.msra.mxu0 0.0
    %66 = vmatpush.msra.mxu0 0.0
    %67 = vmatpush.msra.mxu0 %v47
    %68 = vmatpush.msra.mxu0 %v46
    %69 = vmatpush.msra.mxu0 %v45
    %70 = vmatpush.msra.mxu0 %v44
    %71 = vmatmul.f32.gmra.mxu0 %v50
    %v72 = vpop.f32.mrf.mxu0
    %v73 = vadd.f32 0.0, %v72
    %74 = vmatmul.f32.gmra.mxu0 %v53
    %v75 = vpop.f32.mrf.mxu0
    %v76 = vadd.f32 0.0, %v75
    %77 = vdwg.mxu0
    %v78 = vmul.f32 %v73, 11.313708
    %v79 = vmul.f32 %v76, 11.313708
    %80 = vst [vmem:[#allocation5] sm:$0xff] %v78
    %81 = vst [vmem:[#allocation5 + $0x8] sm:$0xff] %v79
    // Predicated region
    $region14: #{tpu_custom_call.1} parent=1 // pred_check
      _
    $region15: #{tpu_custom_call.1} parent=1 // pred_check_branch
      %83 = sbr.rel (0) target = $region17
    $region16: #{tpu_custom_call.1} parent=1 // pred_region
      %85 = vsyncadd [#allocation4], 0
      %s86 = sshll.u32 [#allocation5], 4
      %s87 = int_to_ptr.vmem [resolvable:$true] %s86
      %s88 = sshll.u32 %s2, 4
      %s89 = int_to_ptr.hbm [resolvable:$true] %s88
      %94 = dma.vmem_to_hbm [thread:$0]  %s87, 256, %s89, [#allocation4], 128, 128, 8
    $region17: #{tpu_custom_call.1} parent=1 // pred_fallthru
      _
    // Predicated region
    $region18: #{tpu_custom_call.1} parent=1 // pred_check
      _
    $region19: #{tpu_custom_call.1} parent=1 // pred_check_branch
      %96 = sbr.rel (0) target = $region21
    $region20: #{tpu_custom_call.1} parent=1 // pred_region
      %98 = dma.done [#allocation4], 256
    $region21: #{tpu_custom_call.1} parent=1 // pred_fallthru
      _
    %99 = vsyncpa [#allocation3], 1
    %100 = vsyncpa [#allocation4], 1

</llo_original>
